<compile_context>
chip_gen: v7x
topology: tpu7x:2x2x1
jax: 0.10.0
libtpu: 0.0.40
codegen_flags: <defaults>
</compile_context>

<pallas_src>
import functools
import math

import jax
import jax.numpy as jnp
import numpy as np
from jax.experimental import pallas as pl
from jax.experimental.pallas import tpu as pltpu


def _pte_kernel(sc_ref, coef_ref, out_ref, *, k, num_groups):
    """One (tile_p, D) tile of the temporal encoding, D = k * d_model.

    sc_ref:   (tile_p, 2k) f32 -- per physical row, k interleaved pairs
              [doy-1, group] (one pair per packed logical row).
    coef_ref: (2 + k + num_groups, D) f32 resident block:
              row 0          : DOY frequencies (0 on group lanes), tiled k x
              row 1          : DOY phase (pi/2 on cos lanes, 0 on group lanes)
              rows 2..2+k-1  : 0/1 slot masks (lane belongs to packed slot s)
              rows 2+k..     : group-encoding table rows (0 on DOY lanes)
    out_ref:  (tile_p, D)
    """
    sc = sc_ref[...]
    coef = coef_ref[...]
    w = coef[0:1, :]
    phase = coef[1:2, :]

    # Broadcast each packed row's scalars across its slot lanes using the
    # host-built slot masks (for k == 1 this is a plain column broadcast).
    doy = sc[:, 0:1] * coef[2:3, :]
    grp = sc[:, 1:2] * coef[2:3, :]
    for s in range(1, k):
        doy = doy + sc[:, 2 * s:2 * s + 1] * coef[2 + s:3 + s, :]
        grp = grp + sc[:, 2 * s + 1:2 * s + 2] * coef[2 + s:3 + s, :]

    # DOY half: sin(pos * w + phase); cos lanes via the +pi/2 phase fold.
    # doy == 0 (pos < 0) rows are zeroed by a single per-row validity factor,
    # matching the all-zero row 0 of the PyTorch pe_doy buffer.  Group lanes
    # have w = phase = 0 so they contribute exactly 0 here.
    # NOTE: the +pi/2 fold adds ~1 ulp of argument error only for doy >> 366;
    # real day-of-year inputs stay <= 366 where the mismatch is ~1e-5.
    valid = (doy >= 0.0).astype(jnp.float32)
    val = jnp.sin(doy * w + phase) * valid

    # Group half: exact table rows selected by group id (no transcendental).
    # Table rows are 0 on DOY lanes so a plain add composes the two halves.
    genc = jnp.zeros_like(val)
    for g in range(num_groups):
        genc = jnp.where(grp == jnp.float32(g), coef[2 + k + g:3 + k + g, :], genc)

    out_ref[...] = (val + genc).astype(out_ref.dtype)


def _round_up(x, m):
    return ((x + m - 1) // m) * m


def _pick_pack_factor(n_rows, d_model):
    """k logical rows packed per 128-lane physical output row (lane-dense out)."""
    if d_model >= 128 or 128 % d_model != 0:
        return 1
    k = 128 // d_model
    if k > 8 or n_rows % k != 0:   # keep every wrapper reshape metadata-only
        return 1
    return k


def _pick_tile_rows(P, D, out_itemsize):
    """Rows per tile + per-row VMEM bytes (double-buffered out + scalar block)."""
    # The (rows, 2k) scalar block lane-pads to 128 lanes in VMEM: charge it.
    per_row = 2 * (D * out_itemsize + 128 * 4)
    budget = 24 << 20            # sized against v7x: 64 MiB phys / 32 MiB scoped
    rows = max(8, min(16384, (budget // per_row) // 8 * 8))
    # Keep >= 2 grid steps when possible so both v7x TensorCores get work.
    rows = min(rows, _round_up(-(-P // 2), 8))
    rows = min(rows, max(8, _round_up(P, 8)))
    return rows, per_row


def _build_coefs(d_model, T, num_groups, k):
    """(2 + k + num_groups, k*d_model) resident coefficient block."""
    doy_dim = d_model // 2
    group_dim = d_model - doy_dim
    assert doy_dim % 2 == 0 and group_dim % 2 == 0, "d_model must be divisible by 4"
    D = k * d_model
    lnT = math.log(T)

    # DOY frequencies / phases, exactly as the module's div_term.
    div = np.exp(np.arange(0, doy_dim, 2, dtype=np.float32) *
                 np.float32(-(lnT / doy_dim)))
    w_base = np.zeros((d_model,), np.float32)
    w_base[0:doy_dim:2] = div
    w_base[1:doy_dim:2] = div
    phase_base = np.zeros((d_model,), np.float32)
    phase_base[1:doy_dim:2] = np.float32(math.pi / 2.0)

    # Group table, exactly as the module's pe_group buffer.
    pe_group = np.zeros((num_groups, group_dim), np.float32)
    gpos = np.arange(num_groups, dtype=np.float32)[:, None]
    gdiv = np.exp(np.arange(0, group_dim, 2, dtype=np.float32) *
                  np.float32(-(lnT / group_dim)))
    pe_group[:, 0::2] = np.sin(gpos * gdiv)
    pe_group[:, 1::2] = np.cos(gpos * gdiv)
    gt_base = np.zeros((num_groups, d_model), np.float32)
    gt_base[:, doy_dim:] = pe_group

    masks = np.zeros((k, D), np.float32)
    for s in range(k):
        masks[s, s * d_model:(s + 1) * d_model] = 1.0

    return np.concatenate(
        [np.tile(w_base, k)[None, :],
         np.tile(phase_base, k)[None, :],
         masks,
         np.tile(gt_base, (1, k))], axis=0)


@functools.partial(
    jax.jit,
    static_argnames=("d_model", "T", "num_groups", "max_len", "out_dtype"))
def positional_temporal_encoding(doy, group, *, d_model, T=10000, num_groups=3,
                                 max_len=3000, out_dtype=jnp.float32):
    """JAX/Pallas equivalent of PositionalTemporalEncoding.forward.

    doy:   (B, S) integer day-of-year indices in [0, max_len] (0 => zero DOY enc.)
    group: (B, S) integer group ids in [0, num_groups)
    Returns (B, S, d_model, 1, 1).
    """
    del max_len  # table-free: the encoding is recomputed directly from indices
    assert d_model % 4 == 0, "d_model must be divisible by 4"
    B, S = doy.shape
    N = B * S

    k = _pick_pack_factor(N, d_model)     # logical rows per physical output row
    D = k * d_model
    P = N // k

    coefs = jnp.asarray(_build_coefs(d_model, T, num_groups, k))  # (2+k+G, D)

    doy_pos = doy.reshape(N).astype(jnp.int32).astype(jnp.float32) - 1.0
    grp = group.reshape(N).astype(jnp.int32).astype(jnp.float32)
    # (N, 2) -> (P, 2k): pure metadata reshape (row-major interleaving).
    scalars = jnp.stack([doy_pos, grp], axis=-1).reshape(P, 2 * k)

    out_itemsize = np.dtype(out_dtype).itemsize
    tile_p, per_row = _pick_tile_rows(P, D, out_itemsize)
    grid = (pl.cdiv(P, tile_p),)          # ragged last block is masked by Pallas
    vmem_limit = int(min(48 << 20,
                         max(16 << 20,
                             per_row * tile_p + coefs.size * 4 + (4 << 20))))

    kernel = functools.partial(_pte_kernel, k=k, num_groups=num_groups)
    out = pl.pallas_call(
        kernel,
        out_shape=jax.ShapeDtypeStruct((P, D), out_dtype),
        grid_spec=pltpu.PrefetchScalarGridSpec(
            num_scalar_prefetch=0,
            grid=grid,
            in_specs=[
                pl.BlockSpec((tile_p, 2 * k), lambda i: (i, 0)),   # per-row scalars
                pl.BlockSpec(coefs.shape, lambda i: (0, 0)),       # resident coefs
            ],
            out_specs=pl.BlockSpec((tile_p, D), lambda i: (i, 0)),
        ),
        compiler_params=pltpu.CompilerParams(
            dimension_semantics=("parallel",),
            vmem_limit_bytes=vmem_limit),
    )(scalars, coefs)

    # (P, k*d) is the exact (N, d) result in row-major order: metadata-only
    # reshape to 'b n c 1 1'.
    return out.reshape(B, S, d_model, 1, 1)


def _reference(doy, group, *, d_model, T=10000, num_groups=3, max_len=3000):
    """Faithful numpy port of the PyTorch module (table build + gather)."""
    doy = np.asarray(doy, dtype=np.int64)
    group = np.asarray(group, dtype=np.int64)
    doy_dim = d_model // 2
    group_dim = d_model - doy_dim

    pe_doy = np.zeros((max_len + 1, doy_dim), np.float32)
    position = np.arange(0, max_len, dtype=np.float32)[:, None]
    div_term = np.exp(np.arange(0, doy_dim, 2, dtype=np.float32) *
                      np.float32(-(math.log(T) / doy_dim)))
    pe_doy[1:, 0::2] = np.sin(position * div_term)
    pe_doy[1:, 1::2] = np.cos(position * div_term)

    pe_group = np.zeros((num_groups, group_dim), np.float32)
    gpos = np.arange(num_groups, dtype=np.float32)[:, None]
    gdiv = np.exp(np.arange(0, group_dim, 2, dtype=np.float32) *
                  np.float32(-(math.log(T) / group_dim)))
    pe_group[:, 0::2] = np.sin(gpos * gdiv)
    pe_group[:, 1::2] = np.cos(gpos * gdiv)

    res_doy = pe_doy[doy]            # (B, S, doy_dim)
    res_group = pe_group[group]      # (B, S, group_dim)
    res = np.concatenate([res_doy, res_group], axis=-1)
    return res[..., None, None]      # (B, S, d_model, 1, 1)


if __name__ == "__main__":
    key = jax.random.PRNGKey(0)
    k1, k2, k3, k4 = jax.random.split(key, 4)

    num_groups = 3

    def check(doy, group, d_model, tol=2e-4):
        out = positional_temporal_encoding(doy, group, d_model=d_model, T=10000,
                                           num_groups=num_groups, max_len=3000)
        out = jax.block_until_ready(out)
        ref = _reference(doy, group, d_model=d_model, T=10000,
                         num_groups=num_groups, max_len=3000)
        assert out.shape == ref.shape, (out.shape, ref.shape)
        err = float(np.max(np.abs(np.asarray(out, dtype=np.float32) - ref)))
        assert err < tol, (d_model, err)

    # Case 1: d_model = 128 (already lane-dense, k = 1); two parallel grid steps.
    B, S = 2, 8
    doy = jax.random.randint(k1, (B, S), 0, 367, dtype=jnp.int32)
    doy = doy.at[0, 0].set(0)                       # exercise the zero-DOY row
    group = jax.random.randint(k2, (B, S), 0, num_groups, dtype=jnp.int32)
    check(doy, group, d_model=128)

    # Case 2: d_model = 32 -> k = 4 rows packed per 128-lane output row.
    check(doy, group, d_model=32)

    # Case 3: ragged row count (N = 15, not a multiple of 8) -> masked partial
    # last block, k = 1 fallback, 64-wide (non-lane-dense) feature dim.
    doy3 = jax.random.randint(k3, (3, 5), 0, 367, dtype=jnp.int32)
    doy3 = doy3.at[1, 2].set(0)
    group3 = jax.random.randint(k4, (3, 5), 0, num_groups, dtype=jnp.int32)
    check(doy3, group3, d_model=64)

    print("KERNEL_OK")
</pallas_src>

<mosaic_0001>
module attributes {stable_mosaic.version = 11 : i64} {
  func.func @_pte_kernel(%arg0: i32, %arg1: memref<8x2xf32, #tpu.memory_space<vmem>>, %arg2: memref<6x128xf32, #tpu.memory_space<vmem>>, %arg3: memref<8x128xf32, #tpu.memory_space<vmem>>) attributes {dimension_semantics = [#tpu.dimension_semantics<parallel>], iteration_bounds = array<i64: 2>, scalar_prefetch = 0 : i64, scratch_operands = 0 : i64, tpu.core_type = #tpu.core_type<tc>, window_params = [{transform_indices = @transform_0, window_bounds = array<i64: 8, 2>}, {pipeline_mode = #tpu.pipeline_mode<synchronous>, transform_indices = @transform_1, window_bounds = array<i64: 6, 128>}, {transform_indices = @transform_2, window_bounds = array<i64: 8, 128>}]} {
    %c0 = arith.constant 0 : index
    %c0_0 = arith.constant 0 : index
    %0 = vector.load %arg1[%c0, %c0_0] : memref<8x2xf32, #tpu.memory_space<vmem>>, vector<8x2xf32>
    %c0_1 = arith.constant 0 : index
    %c0_2 = arith.constant 0 : index
    %1 = vector.load %arg2[%c0_1, %c0_2] : memref<6x128xf32, #tpu.memory_space<vmem>>, vector<6x128xf32>
    %2 = vector.extract_strided_slice %1 {offsets = [0, 0], sizes = [1, 128], strides = [1, 1]} : vector<6x128xf32> to vector<1x128xf32>
    %3 = vector.extract_strided_slice %1 {offsets = [1, 0], sizes = [1, 128], strides = [1, 1]} : vector<6x128xf32> to vector<1x128xf32>
    %4 = vector.extract_strided_slice %0 {offsets = [0, 0], sizes = [8, 1], strides = [1, 1]} : vector<8x2xf32> to vector<8x1xf32>
    %5 = vector.extract_strided_slice %1 {offsets = [2, 0], sizes = [1, 128], strides = [1, 1]} : vector<6x128xf32> to vector<1x128xf32>
    %6 = vector.broadcast %4 : vector<8x1xf32> to vector<8x128xf32>
    %7 = vector.broadcast %5 : vector<1x128xf32> to vector<8x128xf32>
    %8 = arith.mulf %6, %7 : vector<8x128xf32>
    %9 = vector.extract_strided_slice %0 {offsets = [0, 1], sizes = [8, 1], strides = [1, 1]} : vector<8x2xf32> to vector<8x1xf32>
    %10 = vector.extract_strided_slice %1 {offsets = [2, 0], sizes = [1, 128], strides = [1, 1]} : vector<6x128xf32> to vector<1x128xf32>
    %11 = vector.broadcast %9 : vector<8x1xf32> to vector<8x128xf32>
    %12 = vector.broadcast %10 : vector<1x128xf32> to vector<8x128xf32>
    %13 = arith.mulf %11, %12 : vector<8x128xf32>
    %cst = arith.constant 0.000000e+00 : f32
    %14 = vector.broadcast %cst : f32 to vector<8x128xf32>
    %15 = arith.cmpf oge, %8, %14 : vector<8x128xf32>
    %16 = arith.extui %15 : vector<8x128xi1> to vector<8x128xi32>
    %17 = arith.sitofp %16 : vector<8x128xi32> to vector<8x128xf32>
    %18 = vector.broadcast %2 : vector<1x128xf32> to vector<8x128xf32>
    %19 = arith.mulf %8, %18 : vector<8x128xf32>
    %20 = vector.broadcast %3 : vector<1x128xf32> to vector<8x128xf32>
    %21 = arith.addf %19, %20 : vector<8x128xf32>
    %22 = math.sin %21 : vector<8x128xf32>
    %23 = arith.mulf %22, %17 : vector<8x128xf32>
    %cst_3 = arith.constant 0.000000e+00 : f32
    %24 = vector.broadcast %cst_3 : f32 to vector<8x128xf32>
    %cst_4 = arith.constant 0.000000e+00 : f32
    %25 = vector.broadcast %cst_4 : f32 to vector<8x128xf32>
    %26 = arith.cmpf oeq, %13, %25 : vector<8x128xf32>
    %27 = vector.extract_strided_slice %1 {offsets = [3, 0], sizes = [1, 128], strides = [1, 1]} : vector<6x128xf32> to vector<1x128xf32>
    %28 = vector.shape_cast %27 : vector<1x128xf32> to vector<1x128xf32>
    %29 = vector.broadcast %28 : vector<1x128xf32> to vector<8x128xf32>
    %30 = arith.select %26, %29, %24 : vector<8x128xi1>, vector<8x128xf32>
    %cst_5 = arith.constant 1.000000e+00 : f32
    %31 = vector.broadcast %cst_5 : f32 to vector<8x128xf32>
    %32 = arith.cmpf oeq, %13, %31 : vector<8x128xf32>
    %33 = vector.extract_strided_slice %1 {offsets = [4, 0], sizes = [1, 128], strides = [1, 1]} : vector<6x128xf32> to vector<1x128xf32>
    %34 = vector.shape_cast %33 : vector<1x128xf32> to vector<1x128xf32>
    %35 = vector.broadcast %34 : vector<1x128xf32> to vector<8x128xf32>
    %36 = arith.select %32, %35, %30 : vector<8x128xi1>, vector<8x128xf32>
    %cst_6 = arith.constant 2.000000e+00 : f32
    %37 = vector.broadcast %cst_6 : f32 to vector<8x128xf32>
    %38 = arith.cmpf oeq, %13, %37 : vector<8x128xf32>
    %39 = vector.extract_strided_slice %1 {offsets = [5, 0], sizes = [1, 128], strides = [1, 1]} : vector<6x128xf32> to vector<1x128xf32>
    %40 = vector.shape_cast %39 : vector<1x128xf32> to vector<1x128xf32>
    %41 = vector.broadcast %40 : vector<1x128xf32> to vector<8x128xf32>
    %42 = arith.select %38, %41, %36 : vector<8x128xi1>, vector<8x128xf32>
    %43 = arith.addf %23, %42 : vector<8x128xf32>
    %c0_7 = arith.constant 0 : index
    %c0_8 = arith.constant 0 : index
    %44 = vector.load %arg3[%c0_7, %c0_8] : memref<8x128xf32, #tpu.memory_space<vmem>>, vector<8x128xf32>
    tpu.vector_store %arg3[%c0_7, %c0_8], %43 {strides = array<i32>} : memref<8x128xf32, #tpu.memory_space<vmem>>, vector<8x128xf32>,
    return
  }
  func.func @transform_0(%arg0: i32) -> (i32, i32) {
    %c0_i32 = arith.constant 0 : i32
    %c0_i32_0 = arith.constant 0 : i32
    return %arg0, %c0_i32 : i32, i32
  }
  func.func @transform_1(%arg0: i32) -> (i32, i32) {
    %c0_i32 = arith.constant 0 : i32
    %c0_i32_0 = arith.constant 0 : i32
    %c0_i32_1 = arith.constant 0 : i32
    return %c0_i32, %c0_i32_0 : i32, i32
  }
  func.func @transform_2(%arg0: i32) -> (i32, i32) {
    %c0_i32 = arith.constant 0 : i32
    %c0_i32_0 = arith.constant 0 : i32
    return %arg0, %c0_i32 : i32, i32
  }
}

</mosaic_0001>

<llo_original>
// kernel: positional_temporal_encoding.1
$region0: #{positional_temporal_encoding.1}
  #allocation0 [shape = 'u32[]', space=smem, size = 0x4, offset = 0x4, fixed_abs, tag = 'smem constant byte address 0x4 - core index']
  #allocation1 [shape = 'u32[144,128]{1,0:T(1,128)}', space=vmem, size = 0x12000, scoped, tag = 'internal scratch']
  %s0 = inlined_call_operand.vmem [shape: f32[16,2], index: 0, kind: input, shape index: {}]
  %s1 = inlined_call_operand.vmem [shape: f32[6,128], index: 1, kind: input, shape index: {}]
  %s2 = inlined_call_operand.hbm [shape: f32[16,128], index: 2, kind: output, shape index: {}]
  %s3 = sld [smem:[#allocation0]]
  $region41: #{positional_temporal_encoding.1} parent=0
    _
  %s5 = ssub.s32 1, %s3
  %s6 = scalar_select 0, %s5, %s3
  $region1: #{positional_temporal_encoding.1} parent=0
    #allocation2 [shape = 'u8[8192]{0}', space=vmem, size = 0x2000, scoped, tag = 'output window, operand 0']
    #allocation3 [shape = 's32[2]{0}', space=sflag, size = 0x8, scoped, tag = 'scoped memory for positional_temporal_encoding.1']
    %7 = vsyncpa [#allocation3], 0
    %s8 = scalar_lea.sflag [#allocation3], 1
    %9 = vsyncpa %s8, 0
    loop: start=0, step=1, limit=4
    $region2: #{positional_temporal_encoding.1} parent=1 // loop_pre_header
      _
    $region3: #{positional_temporal_encoding.1} parent=1 // loop_header
      %s11 = sphi 0, %s15
      %p12 = scmp.ge.s32.totalorder %s11, 4
      %s21 = sphi 0, %s23
      %s24 = sphi 0, %s21
      %s25 = sphi 0, %s24
      %s41 = sphi 0, %s25
      %s45 = sphi 0, %s45
      %s47 = sphi 0, %s45
      %s48 = sphi 0, %s47
      %s62 = sphi 0, %s48
      %s68 = sphi 0, %s70
      %s71 = sphi 0, %s68
      %s72 = sphi 0, %s71
      %s88 = sphi 0, %s72
    $region4: #{positional_temporal_encoding.1} parent=1 // loop_header_branch
      %14 = sbr.rel (%p12) target = $region8
    $region5: #{positional_temporal_encoding.1} parent=1 // loop_body
      %s16 = ssub.s32 %s11, 1
      %s17 = ssub.s32 %s11, 2
      %s18 = sadd.s32 %s11, 1
      %s19 = ssub.s32 %s11, %s18
      %p20 = scmp.eq.s32.totalorder %s19, 0
      %s22 = sadd.s32 %s21, 1
      %s23 = scalar_select %p20, %s21, %s22
      %p26 = pneg %p20
      %p27 = scmp.eq.s32.totalorder %s11, 1
      %p28 = por %p26, %p27
      %p29 = scmp.ne.s32.totalorder %s21, %s24
      %p30 = scmp.eq.s32.totalorder %s11, 0
      %p31 = por %p29, %p30
      %p32 = scmp.ne.s32.totalorder %s21, %s24
      %p33 = scmp.eq.s32.totalorder %s16, 1
      %p34 = por %p32, %p33
      %p35 = scmp.ne.s32.totalorder %s24, %s25
      %p36 = scmp.eq.s32.totalorder %s16, 0
      %p37 = por %p35, %p36
      %p38 = scmp.ne.s32.totalorder %s24, %s25
      %p39 = scmp.eq.s32.totalorder %s17, 1
      %p40 = por %p38, %p39
      %p42 = scmp.ne.s32.totalorder %s25, %s41
      %p43 = scmp.eq.s32.totalorder %s17, 0
      %p44 = por %p42, %p43
      %s46 = sadd.s32 %s45, 1
      %p49 = scmp.eq.s32.totalorder %s11, 1
      %p50 = scmp.ne.s32.totalorder %s45, %s47
      %p51 = scmp.eq.s32.totalorder %s11, 0
      %p52 = por %p50, %p51
      %p53 = scmp.ne.s32.totalorder %s45, %s47
      %p54 = scmp.eq.s32.totalorder %s16, 1
      %p55 = por %p53, %p54
      %p56 = scmp.ne.s32.totalorder %s47, %s48
      %p57 = scmp.eq.s32.totalorder %s16, 0
      %p58 = por %p56, %p57
      %p59 = scmp.ne.s32.totalorder %s47, %s48
      %p60 = scmp.eq.s32.totalorder %s17, 1
      %p61 = por %p59, %p60
      %p63 = scmp.ne.s32.totalorder %s48, %s62
      %p64 = scmp.eq.s32.totalorder %s17, 0
      %p65 = por %p63, %p64
      %s66 = ssub.s32 %s11, %s18
      %p67 = scmp.eq.s32.totalorder %s66, 0
      %s69 = sadd.s32 %s68, 1
      %s70 = scalar_select %p67, %s68, %s69
      %p73 = pneg %p67
      %p74 = scmp.eq.s32.totalorder %s11, 1
      %p75 = por %p73, %p74
      %p76 = scmp.ne.s32.totalorder %s68, %s71
      %p77 = scmp.eq.s32.totalorder %s11, 0
      %p78 = por %p76, %p77
      %p79 = scmp.ne.s32.totalorder %s68, %s71
      %p80 = scmp.eq.s32.totalorder %s16, 1
      %p81 = por %p79, %p80
      %p82 = scmp.ne.s32.totalorder %s71, %s72
      %p83 = scmp.eq.s32.totalorder %s16, 0
      %p84 = por %p82, %p83
      %p85 = scmp.ne.s32.totalorder %s71, %s72
      %p86 = scmp.eq.s32.totalorder %s17, 1
      %p87 = por %p85, %p86
      %p89 = scmp.ne.s32.totalorder %s72, %s88
      %p90 = scmp.eq.s32.totalorder %s17, 0
      %p91 = por %p89, %p90
      %p92 = scmp.le.s32.totalorder 1, %s11
      %p93 = scmp.lt.s32.totalorder %s11, 3
      %p94 = pnand %p92, %p93
      %p95 = pneg %p94
      // Predicated region
      $region9: #{positional_temporal_encoding.1} parent=5 // pred_check
        _
      $region10: #{positional_temporal_encoding.1} parent=5 // pred_check_branch
        %97 = sbr.rel (%p94) target = $region12
      $region11: #{positional_temporal_encoding.1} parent=5 // pred_region
        %s98 = ssub.s32 %s11, 1
        // Predicated region
        $region13: #{positional_temporal_encoding.1} parent=11 // pred_check
          %p99 = pneg %p58
        $region14: #{positional_temporal_encoding.1} parent=11 // pred_check_branch
          %101 = sbr.rel (%p99) target = $region16
        $region15: #{positional_temporal_encoding.1} parent=11 // pred_region
          _
        $region16: #{positional_temporal_encoding.1} parent=11 // pred_fallthru
          _
      $region12: #{positional_temporal_encoding.1} parent=5 // pred_fallthru
        _
      %p102 = scmp.lt.s32.totalorder %s11, 2
      // Predicated region
      $region17: #{positional_temporal_encoding.1} parent=5 // pred_check
        %p103 = pneg %p102
      $region18: #{positional_temporal_encoding.1} parent=5 // pred_check_branch
        %105 = sbr.rel (%p103) target = $region20
      $region19: #{positional_temporal_encoding.1} parent=5 // pred_region
        // Predicated region
        $region21: #{positional_temporal_encoding.1} parent=19 // pred_check
          %p106 = pneg %p31
        $region22: #{positional_temporal_encoding.1} parent=19 // pred_check_branch
          %108 = sbr.rel (%p106) target = $region24
        $region23: #{positional_temporal_encoding.1} parent=19 // pred_region
          %p109 = scmp.lt.s32.totalorder %s11, 1
          %s110 = scalar_select %p109, %s11, 1
          %s111 = smul.addr %s110, 8
          %s112 = scalar_lea.vmem %s0, %s111
        $region24: #{positional_temporal_encoding.1} parent=19 // pred_fallthru
          _
      $region20: #{positional_temporal_encoding.1} parent=5 // pred_fallthru
        _
      %p113 = scmp.le.s32.totalorder 1, %s11
      %p114 = scmp.lt.s32.totalorder %s11, 3
      %p115 = pnand %p113, %p114
      %p116 = pneg %p115
      // Predicated region
      $region25: #{positional_temporal_encoding.1} parent=5 // pred_check
        _
      $region26: #{positional_temporal_encoding.1} parent=5 // pred_check_branch
        %118 = sbr.rel (%p115) target = $region28
      $region27: #{positional_temporal_encoding.1} parent=5 // pred_region
        %s119 = ssub.s32 %s11, 1
        %p120 = scmp.lt.s32.totalorder %s16, 1
        %s121 = scalar_select %p120, %s16, 1
        %s122 = smul.addr %s121, 8
        %s123 = scalar_lea.vmem %s0, %s122
        %p124 = pneg %p37
        %p125 = pneg %p34
        %p126 = pneg %p58
        %p127 = pneg %p55
        %p128 = pneg %p84
        %p129 = pneg %p81
        %s130 = sand.u32 %s71, 1
        %s131 = scalar_lea.sflag [#allocation3], %s130
        %s132 = sand.u32 %s71, 1
        %s133 = smul.addr %s132, 8
        %s134 = scalar_lea.vmem [#allocation2], %s133
        %p135 = scmp.lt.s32.totalorder %s16, 1
        %s136 = scalar_select %p135, %s16, 1
        %s137 = smul.addr %s136, 8
        %s138 = scalar_lea.vmem %s0, %s137
        %v139 = vld [vmem:[%s138] sm:$0xff]
        %v140 = vld [vmem:[%s1] sm:$0x3f]
        %142 = vset.pattern.permute.xlu0 0
        %143 = vperm.xlu0 %142, %v139
        %v144 = vpop.permute.xlu0 %143
        %v146 = vlaneseq
        %v147 = vshrl.u32 %v146, 7
        %v148 = vsub.s32 2, %v147
        %v149 = vrot.slane %v140, %v148
        %v150 = vmul.f32 %v144, %v149
        %151 = vset.pattern.permute.xlu0 1
        %152 = vperm.xlu0 %151, %v139
        %v153 = vpop.permute.xlu0 %152
        %v155 = vmul.f32 %v153, %v149
        %vm156 = vcmp.ge.f32.partialorder %v150, 0.0
        %v157 = vsel %vm156, 1, 0
        %v158 = vcvt.s32.f32 %v157
        %v159 = vlaneseq
        %v160 = vshrl.u32 %v159, 7
        %v161 = vsub.s32 0, %v160
        %v162 = vrot.slane %v140, %v161
        %v163 = vmul.f32 %v150, %v162
        %v164 = vlaneseq
        %v165 = vshrl.u32 %v164, 7
        %v166 = vsub.s32 1, %v165
        %v167 = vrot.slane %v140, %v166
        %v168 = vadd.f32 %v163, %v167
        %v169 = vand.u32 2147483647, %v168
        %vm170 = vcmp.le.f32.partialorder %v169, 0.7853982
        %vm171 = vcmp.lt.s32.totalorder %v168, 0
        %v172 = vand.u32 %v168, 2139095040
        %v173 = vshrl.u32 %v172, 23
        %v174 = vsub.s32 %v173, 127
        %v175 = vand.u32 2147483647, %v168
        %v176 = vand.u32 %v175, 8388607
        %v177 = vor.u32 %v176, 8388608
        %v178 = vsub.s32 0, %v177
        %v179 = vadd.s32 %v174, 1
        %vm180 = vcmp.gt.s32.totalorder %v179, 0
        %v181 = vsel %vm180, %v179, 0
        %v182 = vshrl.u32 %v181, 5
        %v183 = vand.u32 %v181, 31
        %v184 = vsub.s32 32, %v183
        %v185 = vshrl.u32 683565275, %v184
        %v186 = vshll.u32 683565275, %v183
        %v187 = vshrl.u32 2475754826, %v184
        %v188 = vor.u32 %v186, %v187
        %v189 = vshll.u32 2475754826, %v183
        %v190 = vshrl.u32 2131351028, %v184
        %v191 = vor.u32 %v189, %v190
        %v192 = vshll.u32 2131351028, %v183
        %v193 = vshrl.u32 2102212464, %v184
        %v194 = vor.u32 %v192, %v193
        %v195 = vshll.u32 2102212464, %v183
        %v196 = vshrl.u32 920167782, %v184
        %v197 = vor.u32 %v195, %v196
        %v198 = vshll.u32 920167782, %v183
        %v199 = vshrl.u32 1326507024, %v184
        %v200 = vor.u32 %v198, %v199
        %vm201 = vcmp.lt.s32.totalorder %v182, 1
        %vm202 = vcmp.lt.s32.totalorder %v182, 2
        %vm203 = vcmp.lt.s32.totalorder %v182, 3
        %vm204 = vcmp.lt.s32.totalorder %v182, 4
        %v205 = vsel %vm201, %v185, %v188
        %v206 = vsel %vm204, %v194, 2102212464
        %v207 = vsel %vm203, %v191, %v206
        %v208 = vsel %vm202, %v205, %v207
        %v209 = vsel %vm201, %v188, %v191
        %v210 = vsel %vm204, %v197, 920167782
        %v211 = vsel %vm203, %v194, %v210
        %v212 = vsel %vm202, %v209, %v211
        %v213 = vsel %vm201, %v191, %v194
        %v214 = vsel %vm204, %v200, 1326507024
        %v215 = vsel %vm203, %v197, %v214
        %v216 = vsel %vm202, %v213, %v215
        %v217 = vshll.u32 %v177, 8
        %v218 = vmul.u32.u64.compose %v217, %v216
        %v219 = vextract.low.u32 %v218
        %v220 = vextract.high.u32 %v218
        %v221 = vmul.u32.u64.compose %v217, %v212
        %v222 = vextract.low.u32 %v221
        %v223 = vextract.high.u32 %v221
        %v224 = vmul.u32 %v217, %v208
        %v225 = vadd.s32 %v220, %v222
        %vm226 = vc.u32 %v220, %v222
        %v227 = vadd.s32 %v223, 1
        %v228 = vsel %vm226, %v227, %v223
        %v229 = vadd.s32 %v224, %v228
        %v230 = vadd.s32 %v229, 536870912
        %v231 = vshrl.u32 %v230, 30
        %v232 = vshll.u32 %v231, 30
        %v233 = vsub.s32 %v229, %v232
        %vm234 = vcmp.lt.s32.totalorder %v233, 0
        %v235 = vsub.s32 0, %v233
        %v236 = vsel %vm234, %v235, %v233
        %v237 = vclz %v236
        %v238 = vsub.s32 %v237, 2
        %vm239 = vcmp.gt.s32.totalorder 0, %v238
        %v240 = vsel %vm239, 0, %v238
        %v241 = vsub.s32 32, %v240
        %v242 = vshll.u32 %v233, %v240
        %v243 = vshrl.u32 %v225, %v241
        %v244 = vor.u32 %v242, %v243
        %v245 = vsub.s32 4294967266, %v240
        %v246 = vadd.s32 %v245, 127
        %v247 = vshll.u32 %v246, 23
        %v248 = vor.u32 4788187, %v247
        %v249 = vand.u32 2147483647, %v248
        %v251 = vcvt.s32.f32 %v244
        %v252 = vmul.f32 %v251, %v249
        %v253 = vxor.u32 %v252, 2147483648
        %v254 = vsel %vm171, %v253, %v252
        %v255 = vsub.s32 4, %v231
        %v256 = vsel %vm171, %v255, %v231
        %v257 = vsel %vm170, %v168, %v254
        %v258 = vsel %vm170, 0, %v256
        %v259 = vcosq.f32.pop %v257
        %v260 = vsinq.f32.pop %v257
        %vm261 = vweird.f32 %v168
        %v262 = vadd.s32 %v258, 3
        %v263 = vand.u32 %v262, 3
        %vm264 = vcmp.lt.s32.totalorder %v263, 2
        %vm265 = vcmp.eq.s32.totalorder %v263, 0
        %v266 = vxor.u32 %v260, 2147483648
        %v267 = vsel %vm265, %v259, %v266
        %vm268 = vcmp.eq.s32.totalorder %v263, 2
        %v269 = vxor.u32 %v259, 2147483648
        %v270 = vsel %vm268, %v269, %v260
        %v271 = vsel %vm264, %v267, %v270
        %v272 = vsel %vm261, nan, %v271
        %v273 = vmul.f32 %v272, %v158
        %vm274 = vcmp.eq.f32.partialorder %v155, 0.0
        %v275 = vlaneseq
        %v276 = vshrl.u32 %v275, 7
        %v277 = vsub.s32 3, %v276
        %v278 = vrot.slane %v140, %v277
        %v279 = vsel %vm274, %v278, 0.0
        %vm280 = vcmp.eq.f32.partialorder %v155, 1.0
        %v281 = vlaneseq
        %v282 = vshrl.u32 %v281, 7
        %v283 = vsub.s32 4, %v282
        %v284 = vrot.slane %v140, %v283
        %v285 = vsel %vm280, %v284, %v279
        %vm286 = vcmp.eq.f32.partialorder %v155, 2.0
        %v287 = vlaneseq
        %v288 = vshrl.u32 %v287, 7
        %v289 = vsub.s32 5, %v288
        %v290 = vrot.slane %v140, %v289
        %v291 = vsel %vm286, %v290, %v285
        %v292 = vadd.f32 %v273, %v291
        %293 = vst [vmem:[%s134] sm:$0xff] %v292
        %s294 = sand.u32 %s71, 1
        %s295 = scalar_lea.sflag [#allocation3], %s294
        %s296 = sand.u32 %s71, 1
        %s297 = smul.addr %s296, 8
        %s298 = scalar_lea.vmem [#allocation2], %s297
        // Predicated region
        $region29: #{positional_temporal_encoding.1} parent=27 // pred_check
          %p299 = pneg %p81
        $region30: #{positional_temporal_encoding.1} parent=27 // pred_check_branch
          %301 = sbr.rel (%p299) target = $region32
        $region31: #{positional_temporal_encoding.1} parent=27 // pred_region
          %s303 = ssub.s32 128, 128
          %304 = vsyncadd %s295, %s303
          %s305 = smul.addr %s16, 128
          %s306 = scalar_lea.hbm %s2, %s305
          %s308 = sshll.u32 %s298, 4
          %s309 = int_to_ptr.vmem [resolvable:$true] %s308
          %311 = dma.vmem_to_hbm [thread:$0]  %s309, 128, %s306, %s295
        $region32: #{positional_temporal_encoding.1} parent=27 // pred_fallthru
          _
      $region28: #{positional_temporal_encoding.1} parent=5 // pred_fallthru
        _
      %p312 = scmp.le.s32.totalorder 2, %s11
      // Predicated region
      $region33: #{positional_temporal_encoding.1} parent=5 // pred_check
        %p313 = pneg %p312
      $region34: #{positional_temporal_encoding.1} parent=5 // pred_check_branch
        %315 = sbr.rel (%p313) target = $region36
      $region35: #{positional_temporal_encoding.1} parent=5 // pred_region
        %s316 = ssub.s32 %s11, 2
        // Predicated region
        $region37: #{positional_temporal_encoding.1} parent=35 // pred_check
          %p317 = pneg %p87
        $region38: #{positional_temporal_encoding.1} parent=35 // pred_check_branch
          %319 = sbr.rel (%p317) target = $region40
        $region39: #{positional_temporal_encoding.1} parent=35 // pred_region
          %s320 = sand.u32 %s72, 1
          %s321 = scalar_lea.sflag [#allocation3], %s320
          %s322 = sand.u32 %s72, 1
          %s323 = smul.addr %s322, 8
          %s324 = scalar_lea.vmem [#allocation2], %s323
          %325 = dma.done %s321, 128
        $region40: #{positional_temporal_encoding.1} parent=35 // pred_fallthru
          _
      $region36: #{positional_temporal_encoding.1} parent=5 // pred_fallthru
        _
    $region6: #{positional_temporal_encoding.1} parent=1 // loop_footer
      %s15 = sadd.s32 1, %s11
    $region7: #{positional_temporal_encoding.1} parent=1 // loop_footer_branch
      %10 = sbr.rel target = $region3
    $region8: #{positional_temporal_encoding.1} parent=1 // loop_exit
      _
    %326 = vsyncpa [#allocation3], 1
    %s327 = scalar_lea.sflag [#allocation3], 1
    %328 = vsyncpa %s327, 1

</llo_original>
